<compile_context>
chip_gen: v6e
topology: v6e:2x2x1
jax: 0.10.0
libtpu: 0.0.40
codegen_flags: <defaults>
</compile_context>

<pallas_src>
import re

import jax
import jax.numpy as jnp
from jax.experimental import pallas as pl
from jax.experimental.pallas import tpu as pltpu


_SMALL_S_MAX = 8  # S <= this uses the VPU fast path (module's common case is S == 1)


# --------------------------------------------------------------------------- #
# Kernels
# --------------------------------------------------------------------------- #
def _attention_small_s_kernel(q_ref, c_ref, m_ref, wm_ref, wq_ref, out_ref, wts_ref):
    """VPU fast path for small S (S <= _SMALL_S_MAX).

    Block shapes:
      q_ref   : (bt, L, D)
      c_ref   : (bt, S, D)   S small, static
      m_ref   : (bt, 1, L)   int32 mask, lane-dense
      wm_ref  : (D, D)       W[:, :D].T
      wq_ref  : (D, D)       W[:, D:].T
      out_ref : (bt, L, D)
      wts_ref : (bt, S, L)   lane-dense attention weights (wrapper -> [B, L, S])
    """
    bt, L, D = q_ref.shape
    S = c_ref.shape[1]
    mm_dtype = wm_ref.dtype
    f32 = jnp.float32

    q = q_ref[...].astype(f32)                     # (bt, L, D)
    c = c_ref[...].astype(f32)                     # (bt, S, D)
    mask = m_ref[...]                              # (bt, 1, L)

    # scores in lane-dense (bt, S, L): a degenerate M=S MXU matmul would run at
    # ~S/256 utilization, so use VPU multiplies + lane reductions instead.
    rows = []
    for si in range(S):
        c_si = c[:, si:si + 1, :]                                  # (bt, 1, D)
        rows.append(jnp.sum(q * c_si, axis=-1)[:, None, :])        # (bt, 1, L)
    scores = jnp.concatenate(rows, axis=1)                         # (bt, S, L)

    # mask broadcasts over S (sublanes) with no relayout.
    scores = jnp.where(mask == 0, -jnp.inf, scores)

    # nn.Softmax(dim=1): softmax over L -> last-axis lane reduce in this layout.
    mx = jnp.max(scores, axis=-1, keepdims=True)                   # (bt, S, 1)
    e = jnp.exp(scores - mx)
    denom = jnp.sum(e, axis=-1, keepdims=True)
    weights = e * pl.reciprocal(denom, approx=False)               # (bt, S, L)

    # mix[b, l, :] = sum_s weights[b, s, l] * context[b, s, :]
    w_t = jnp.swapaxes(weights, 1, 2)                              # (bt, L, S)
    mix = jnp.zeros((bt, L, D), f32)
    for si in range(S):
        mix = mix + w_t[:, :, si:si + 1] * c[:, si:si + 1, :]      # (bt, L, D)

    # Fused linear_out without the concat: tanh(mix @ Wm + q @ Wq).
    out = jnp.dot(mix.reshape(bt * L, D).astype(mm_dtype), wm_ref[...],
                  preferred_element_type=f32)
    out = out + jnp.dot(q.reshape(bt * L, D).astype(mm_dtype), wq_ref[...],
                        preferred_element_type=f32)
    out_ref[...] = jnp.tanh(out).reshape(bt, L, D).astype(out_ref.dtype)
    wts_ref[...] = weights.astype(wts_ref.dtype)


def _attention_general_kernel(q_ref, c_ref, m_ref, wm_ref, wq_ref,
                              out_ref, wts_ref, acc_ref):
    """General MXU path; S tiled along grid axis 1 ('arbitrary') with a mix accumulator.

    Block shapes:
      q_ref (bt, L, D), c_ref (bt, ts, D), m_ref (bt, 1, L) int32,
      wm_ref/wq_ref (D, D), out_ref (bt, L, D), wts_ref (bt, L, ts),
      acc_ref (bt, L, D) f32 VMEM scratch.
    """
    si = pl.program_id(1)
    bt, L, D = q_ref.shape
    mm_dtype = wm_ref.dtype
    f32 = jnp.float32

    @pl.when(si == 0)
    def _():
        acc_ref[...] = jnp.zeros_like(acc_ref)

    q_mm = q_ref[...].astype(mm_dtype)
    c_mm = c_ref[...].astype(mm_dtype)

    scores = jnp.einsum("bld,bsd->bls", q_mm, c_mm,
                        preferred_element_type=f32)                # (bt, L, ts)

    mask = jnp.reshape(m_ref[...], (bt, L))                        # lane-dense (bt, L)
    scores = jnp.where(mask[:, :, None] == 0, -jnp.inf, scores)

    # nn.Softmax(dim=1): over L. Different S columns are independent, so a
    # per-S-tile softmax is exact (no online rescaling needed).
    mx = jnp.max(scores, axis=1, keepdims=True)
    e = jnp.exp(scores - mx)
    denom = jnp.sum(e, axis=1, keepdims=True)
    weights = e * pl.reciprocal(denom, approx=False)               # (bt, L, ts)

    acc_ref[...] += jnp.einsum("bls,bsd->bld", weights.astype(mm_dtype), c_mm,
                               preferred_element_type=f32)
    wts_ref[...] = weights.astype(wts_ref.dtype)

    @pl.when(si == pl.num_programs(1) - 1)
    def _():
        mix = acc_ref[...]
        out = jnp.dot(mix.reshape(bt * L, D).astype(mm_dtype), wm_ref[...],
                      preferred_element_type=f32)
        out = out + jnp.dot(q_mm.reshape(bt * L, D), wq_ref[...],
                            preferred_element_type=f32)
        out_ref[...] = jnp.tanh(out).reshape(bt, L, D).astype(out_ref.dtype)


# --------------------------------------------------------------------------- #
# Generation-aware sizing
# --------------------------------------------------------------------------- #
def _tpu_generation():
    try:
        dev = jax.devices()[0]
    except Exception:
        return None
    if getattr(dev, "platform", "") != "tpu":
        return None
    kind = getattr(dev, "device_kind", "") or ""
    m = re.search(r"(\d+)", kind)
    return int(m.group(1)) if m else None


def _device_config():
    gen = _tpu_generation()
    if gen is not None and gen >= 7:
        # v7x: 64 MiB physical VMEM, 2 TensorCores -> keep >= 2 parallel grid steps.
        return dict(gen=gen, vmem_budget=36 << 20, vmem_limit=48 << 20,
                    min_batch_steps=2, use_bf16=True)
    if gen == 6:
        return dict(gen=gen, vmem_budget=80 << 20, vmem_limit=100 << 20,
                    min_batch_steps=1, use_bf16=True)
    if gen == 5:
        # v5e: single TC, no bf16 VPU -> keep f32 matmul operands by default.
        return dict(gen=gen, vmem_budget=80 << 20, vmem_limit=100 << 20,
                    min_batch_steps=1, use_bf16=False)
    # Unknown / older generation: conservative budget, leave scoped VMEM alone.
    return dict(gen=gen, vmem_budget=12 << 20, vmem_limit=None,
                min_batch_steps=2, use_bf16=False)


def _per_item_bytes_small(L, S, D, in_b, out_b, mm_b):
    pipelined = 2 * (L * D * in_b + S * D * in_b + L * 4 + L * D * out_b + S * L * 4)
    temps = 4 * S * L * 4 + 3 * L * D * 4 + 2 * L * D * mm_b
    return pipelined + temps


def _per_item_bytes_general(L, ts, D, in_b, out_b, mm_b):
    pipelined = 2 * (L * D * in_b + ts * D * in_b + L * 4 + L * D * out_b + L * ts * 4)
    scratch = L * D * 4
    temps = 3 * L * ts * 4 + 2 * L * D * 4 + (L + ts) * D * mm_b + L * ts * mm_b
    return pipelined + scratch + temps


def _select_block_batch(B, per_item_bytes, fixed_bytes, budget, min_steps):
    """Largest bt that fits the VMEM budget; on multi-TC chips keep >= min_steps
    grid steps (when possible) so every TensorCore gets work."""
    avail = max(budget - fixed_bytes, per_item_bytes)
    bt = max(1, int(avail // per_item_bytes))
    bt = min(bt, B)
    if min_steps > 1 and B >= min_steps:
        bt = min(bt, -(-B // min_steps))
    return max(1, bt)


def _choose_s_block(S, L):
    """Largest multiple-of-128 divisor of S keeping the f32 score tile per batch
    item around <= 2 MiB; fall back to full S when S cannot be tiled cleanly."""
    if S % 128 != 0 or S <= 128:
        return S
    target = max(128, (2 << 20) // (4 * max(L, 1)))
    best = 128
    ts = 128
    while ts <= S:
        if S % ts == 0 and ts <= target:
            best = ts
        ts += 128
    return best


# --------------------------------------------------------------------------- #
# Wrapper
# --------------------------------------------------------------------------- #
def attention_forward(query, context, attention_mask, w, *,
                      use_bf16_matmul=None, block_batch=None, s_block=None):
    """query [B, L, D], context [B, S, D], attention_mask [B, L] (0 = masked,
    may be None), w = linear_out.weight in PyTorch layout [D, 2D] (no bias).
    Returns (output [B, L, D], attention_weights [B, L, S]).

    use_bf16_matmul: None = auto (bf16 MXU operands on v6e/v7x, f32 elsewhere).
    block_batch / s_block: optional overrides (mainly for testing)."""
    B, L, D = query.shape
    S = context.shape[1]
    assert w.shape == (D, 2 * D)

    cfg = _device_config()
    if use_bf16_matmul is None:
        use_bf16_matmul = cfg["use_bf16"]
    mm_dtype = jnp.bfloat16 if use_bf16_matmul else jnp.float32
    mm_bytes = 2 if use_bf16_matmul else 4
    in_bytes = jnp.dtype(query.dtype).itemsize
    out_bytes = in_bytes

    if attention_mask is None:
        attention_mask = jnp.ones((B, L), dtype=jnp.int32)
    mask = attention_mask.astype(jnp.int32).reshape(B, 1, L)       # lane-dense

    # Fused linear_out without concat: out = mix @ W[:, :D].T + q @ W[:, D:].T
    # (one-time XLA slices/transposes, hoisted out of the kernel).
    w_mix = jnp.transpose(w[:, :D]).astype(mm_dtype)               # (D, D)
    w_q = jnp.transpose(w[:, D:]).astype(mm_dtype)                 # (D, D)

    small_s = S <= _SMALL_S_MAX

    if small_s:
        ts = S
    elif s_block is not None:
        assert S % s_block == 0 and (s_block % 128 == 0 or s_block == S)
        ts = int(s_block)
    else:
        ts = _choose_s_block(S, L)

    # VMEM-budgeted batch block + compiler VMEM limit.
    per_item = (_per_item_bytes_small(L, S, D, in_bytes, out_bytes, mm_bytes)
                if small_s else
                _per_item_bytes_general(L, ts, D, in_bytes, out_bytes, mm_bytes))
    fixed = 2 * 2 * D * D * mm_bytes + (2 << 20)   # 2 weight blocks (double-buffered) + slack
    if block_batch is not None:
        bt = max(1, min(int(block_batch), B))
    else:
        bt = _select_block_batch(B, per_item, fixed,
                                 cfg["vmem_budget"], cfg["min_batch_steps"])
    nb = pl.cdiv(B, bt)
    B_pad = nb * bt

    vmem_limit = cfg["vmem_limit"]
    if vmem_limit is not None:
        need = per_item * bt + fixed
        vmem_limit = int(min(vmem_limit, max(need, 32 << 20)))

    # Pad non-divisor batches (mask padded with ones -> padded items stay finite).
    if B_pad != B:
        pad = B_pad - B
        query_p = jnp.concatenate(
            [query, jnp.zeros((pad, L, D), query.dtype)], axis=0)
        context_p = jnp.concatenate(
            [context, jnp.zeros((pad, S, D), context.dtype)], axis=0)
        mask_p = jnp.concatenate(
            [mask, jnp.ones((pad, 1, L), jnp.int32)], axis=0)
    else:
        query_p, context_p, mask_p = query, context, mask

    dims = ("parallel",) if small_s else ("parallel", "arbitrary")
    cp_kwargs = dict(dimension_semantics=dims)
    if vmem_limit is not None:
        cp_kwargs["vmem_limit_bytes"] = vmem_limit
    compiler_params = pltpu.CompilerParams(**cp_kwargs)

    w_spec = pl.BlockSpec((D, D), (lambda b: (0, 0)) if small_s else (lambda b, s: (0, 0)))

    if small_s:
        out, wts_sl = pl.pallas_call(
            _attention_small_s_kernel,
            out_shape=(jax.ShapeDtypeStruct((B_pad, L, D), query.dtype),
                       jax.ShapeDtypeStruct((B_pad, S, L), jnp.float32)),
            grid_spec=pltpu.PrefetchScalarGridSpec(
                num_scalar_prefetch=0,
                grid=(nb,),
                in_specs=[pl.BlockSpec((bt, L, D), lambda b: (b, 0, 0)),
                          pl.BlockSpec((bt, S, D), lambda b: (b, 0, 0)),
                          pl.BlockSpec((bt, 1, L), lambda b: (b, 0, 0)),
                          w_spec, w_spec],
                out_specs=[pl.BlockSpec((bt, L, D), lambda b: (b, 0, 0)),
                           pl.BlockSpec((bt, S, L), lambda b: (b, 0, 0))]),
            compiler_params=compiler_params,
        )(query_p, context_p, mask_p, w_mix, w_q)
        out = out[:B]
        wts_sl = wts_sl[:B]
        # lane-dense [B, S, L] -> [B, L, S] (pure reshape when S == 1).
        wts = wts_sl.reshape(B, L, S) if S == 1 else jnp.transpose(wts_sl, (0, 2, 1))
        return out, wts

    ns = S // ts
    out, wts = pl.pallas_call(
        _attention_general_kernel,
        out_shape=(jax.ShapeDtypeStruct((B_pad, L, D), query.dtype),
                   jax.ShapeDtypeStruct((B_pad, L, S), jnp.float32)),
        grid_spec=pltpu.PrefetchScalarGridSpec(
            num_scalar_prefetch=0,
            grid=(nb, ns),
            in_specs=[pl.BlockSpec((bt, L, D), lambda b, s: (b, 0, 0)),
                      pl.BlockSpec((bt, ts, D), lambda b, s: (b, s, 0)),
                      pl.BlockSpec((bt, 1, L), lambda b, s: (b, 0, 0)),
                      w_spec, w_spec],
            out_specs=[pl.BlockSpec((bt, L, D), lambda b, s: (b, 0, 0)),
                       pl.BlockSpec((bt, L, ts), lambda b, s: (b, 0, s))],
            scratch_shapes=[pltpu.VMEM((bt, L, D), jnp.float32)]),
        compiler_params=compiler_params,
    )(query_p, context_p, mask_p, w_mix, w_q)
    return out[:B], wts[:B]


# --------------------------------------------------------------------------- #
# Pure-JAX reference mirroring the PyTorch forward
# --------------------------------------------------------------------------- #
def _reference(query, context, attention_mask, w):
    scores = jnp.einsum("bld,bsd->bls", query, context)
    if attention_mask is not None:
        scores = jnp.where(attention_mask[:, :, None] == 0, -jnp.inf, scores)
    weights = jax.nn.softmax(scores, axis=1)          # nn.Softmax(dim=1)
    mix = jnp.einsum("bls,bsd->bld", weights, context)
    combined = jnp.concatenate([mix, query], axis=2)
    out = jnp.tanh(jnp.einsum("blk,dk->bld", combined, w))
    return out, weights


if __name__ == "__main__":
    B, L, D = 2, 8, 32   # batch, output length, dimensions

    key = jax.random.PRNGKey(0)
    kq, kc1, kc2, kc3, kw, kq3 = jax.random.split(key, 6)
    query = jax.random.normal(kq, (B, L, D), dtype=jnp.float32)
    w = (jax.random.normal(kw, (D, 2 * D), dtype=jnp.float32)
         * (1.0 / jnp.sqrt(2.0 * D)))
    attention_mask = jnp.ones((B, L), dtype=jnp.int32).at[1, -2:].set(0)

    cases = []

    # (1) S == 1: the module's documented use case -> small-S VPU fast path.
    ctx1 = jax.random.normal(kc1, (B, 1, D), dtype=jnp.float32)
    cases.append(("S=1 fast path", query, ctx1, attention_mask, {}))

    # (2) small S > 1 -> small-S fast path with lane-dense [B, S, L] weights slab.
    ctx2 = jax.random.normal(kc2, (B, 4, D), dtype=jnp.float32)
    cases.append(("S=4 fast path", query, ctx2, attention_mask, {}))

    # (3) larger S -> general MXU path, single S tile.
    ctx3 = jax.random.normal(kc3, (B, 16, D), dtype=jnp.float32)
    cases.append(("S=16 general path", query, ctx3, attention_mask, {}))

    # (4) long context with S tiled over the 'arbitrary' grid axis (forced s_block).
    ctx4 = jax.random.normal(kc1, (B, 256, D), dtype=jnp.float32)
    cases.append(("S=256 tiled path", query, ctx4, attention_mask, {"s_block": 128}))

    # (5) non-divisor batch -> padding path (forced block_batch).
    B3 = 3
    q3 = jax.random.normal(kq3, (B3, L, D), dtype=jnp.float32)
    ctx5 = jax.random.normal(kc2, (B3, 4, D), dtype=jnp.float32)
    mask3 = jnp.ones((B3, L), dtype=jnp.int32).at[2, :3].set(0)
    cases.append(("B=3 padded batch", q3, ctx5, mask3, {"block_batch": 2}))

    # Strict f32 correctness checks (exact semantics, 1e-5 tolerance).
    for name, q_, c_, m_, extra in cases:
        out, wts = attention_forward(q_, c_, m_, w, use_bf16_matmul=False, **extra)
        jax.block_until_ready((out, wts))
        ref_out, ref_wts = _reference(q_, c_, m_, w)
        assert out.shape == ref_out.shape and wts.shape == ref_wts.shape, name
        assert jnp.allclose(out, ref_out, atol=1e-5, rtol=1e-5), f"output mismatch: {name}"
        assert jnp.allclose(wts, ref_wts, atol=1e-5, rtol=1e-5), f"weights mismatch: {name}"

    # Auto precision (bf16 MXU operands on v6e/v7x, f32 elsewhere): exercise it and
    # sanity-check against the f32 reference with a loose bound for the bf16 case.
    out_a, wts_a = attention_forward(query, ctx3, attention_mask, w)
    jax.block_until_ready((out_a, wts_a))
    ref_out, ref_wts = _reference(query, ctx3, attention_mask, w)
    assert jnp.allclose(out_a, ref_out, atol=0.15, rtol=0.15), "auto-precision output off"
    assert jnp.allclose(wts_a, ref_wts, atol=0.15, rtol=0.15), "auto-precision weights off"

    print("KERNEL_OK")
</pallas_src>

<mosaic_0001>
module attributes {stable_mosaic.version = 11 : i64} {
  func.func @_attention_small_s_kernel(%arg0: i32, %arg1: memref<1x8x32xf32, #tpu.memory_space<vmem>>, %arg2: memref<1x1x32xf32, #tpu.memory_space<vmem>>, %arg3: memref<1x1x8xi32, #tpu.memory_space<vmem>>, %arg4: memref<32x32xf32, #tpu.memory_space<vmem>>, %arg5: memref<32x32xf32, #tpu.memory_space<vmem>>, %arg6: memref<1x8x32xf32, #tpu.memory_space<vmem>>, %arg7: memref<1x1x8xf32, #tpu.memory_space<vmem>>) attributes {dimension_semantics = [#tpu.dimension_semantics<parallel>], iteration_bounds = array<i64: 2>, scalar_prefetch = 0 : i64, scratch_operands = 0 : i64, tpu.core_type = #tpu.core_type<tc>, window_params = [{transform_indices = @transform_0, window_bounds = array<i64: 1, 8, 32>}, {transform_indices = @transform_1, window_bounds = array<i64: 1, 1, 32>}, {transform_indices = @transform_2, window_bounds = array<i64: 1, 1, 8>}, {pipeline_mode = #tpu.pipeline_mode<synchronous>, transform_indices = @transform_3, window_bounds = array<i64: 32, 32>}, {pipeline_mode = #tpu.pipeline_mode<synchronous>, transform_indices = @transform_4, window_bounds = array<i64: 32, 32>}, {transform_indices = @transform_5, window_bounds = array<i64: 1, 8, 32>}, {transform_indices = @transform_6, window_bounds = array<i64: 1, 1, 8>}]} {
    %c0 = arith.constant 0 : index
    %c0_0 = arith.constant 0 : index
    %c0_1 = arith.constant 0 : index
    %0 = vector.load %arg1[%c0, %c0_0, %c0_1] : memref<1x8x32xf32, #tpu.memory_space<vmem>>, vector<1x8x32xf32>
    %c0_2 = arith.constant 0 : index
    %c0_3 = arith.constant 0 : index
    %c0_4 = arith.constant 0 : index
    %1 = vector.load %arg2[%c0_2, %c0_3, %c0_4] : memref<1x1x32xf32, #tpu.memory_space<vmem>>, vector<1x1x32xf32>
    %c0_5 = arith.constant 0 : index
    %c0_6 = arith.constant 0 : index
    %c0_7 = arith.constant 0 : index
    %2 = vector.load %arg3[%c0_5, %c0_6, %c0_7] : memref<1x1x8xi32, #tpu.memory_space<vmem>>, vector<1x1x8xi32>
    %3 = vector.broadcast %1 : vector<1x1x32xf32> to vector<1x8x32xf32>
    %4 = arith.mulf %0, %3 : vector<1x8x32xf32>
    %cst = arith.constant dense<0.000000e+00> : vector<1x8xf32>
    %5 = vector.multi_reduction <add>, %4, %cst [2] : vector<1x8x32xf32> to vector<1x8xf32>
    %6 = vector.shape_cast %5 : vector<1x8xf32> to vector<1x1x8xf32>
    %c0_i32 = arith.constant 0 : i32
    %7 = vector.broadcast %c0_i32 : i32 to vector<1x1x8xi32>
    %8 = arith.cmpi eq, %2, %7 : vector<1x1x8xi32>
    %cst_8 = arith.constant 0xFF800000 : f32
    %9 = vector.broadcast %cst_8 : f32 to vector<1x1x8xf32>
    %10 = arith.select %8, %9, %6 : vector<1x1x8xi1>, vector<1x1x8xf32>
    %cst_9 = arith.constant dense<0xFF800000> : vector<1x1xf32>
    %11 = vector.multi_reduction <maximumf>, %10, %cst_9 [2] : vector<1x1x8xf32> to vector<1x1xf32>
    %12 = vector.shape_cast %11 : vector<1x1xf32> to vector<1x1x1xf32>
    %13 = vector.broadcast %12 : vector<1x1x1xf32> to vector<1x1x8xf32>
    %14 = arith.subf %10, %13 : vector<1x1x8xf32>
    %15 = math.exp %14 : vector<1x1x8xf32>
    %cst_10 = arith.constant dense<0.000000e+00> : vector<1x1xf32>
    %16 = vector.multi_reduction <add>, %15, %cst_10 [2] : vector<1x1x8xf32> to vector<1x1xf32>
    %17 = vector.shape_cast %16 : vector<1x1xf32> to vector<1x1x1xf32>
    %18 = tpu.reciprocal %17 : vector<1x1x1xf32> -> vector<1x1x1xf32>
    %19 = vector.broadcast %18 : vector<1x1x1xf32> to vector<1x1x8xf32>
    %20 = arith.mulf %15, %19 : vector<1x1x8xf32>
    %21 = tpu.transpose %20, [0, 2, 1] : vector<1x1x8xf32> -> vector<1x8x1xf32>
    %cst_11 = arith.constant 0.000000e+00 : f32
    %22 = vector.broadcast %cst_11 : f32 to vector<1x8x32xf32>
    %23 = vector.broadcast %21 : vector<1x8x1xf32> to vector<1x8x32xf32>
    %24 = vector.broadcast %1 : vector<1x1x32xf32> to vector<1x8x32xf32>
    %25 = arith.mulf %23, %24 : vector<1x8x32xf32>
    %26 = arith.addf %22, %25 : vector<1x8x32xf32>
    %27 = vector.shape_cast %26 : vector<1x8x32xf32> to vector<8x32xf32>
    %c0_12 = arith.constant 0 : index
    %c0_13 = arith.constant 0 : index
    %28 = vector.load %arg4[%c0_12, %c0_13] : memref<32x32xf32, #tpu.memory_space<vmem>>, vector<32x32xf32>
    %cst_14 = arith.constant dense<0.000000e+00> : vector<8x32xf32>
    %29 = tpu.matmul %27, %28, %cst_14 {dimension_numbers = #tpu.dot_dimension_numbers<[1], [0], [0], [1], [0, 0, 1, 1], [], []>} : vector<8x32xf32>, vector<32x32xf32>, vector<8x32xf32> -> vector<8x32xf32>
    %30 = vector.shape_cast %0 : vector<1x8x32xf32> to vector<8x32xf32>
    %c0_15 = arith.constant 0 : index
    %c0_16 = arith.constant 0 : index
    %31 = vector.load %arg5[%c0_15, %c0_16] : memref<32x32xf32, #tpu.memory_space<vmem>>, vector<32x32xf32>
    %cst_17 = arith.constant dense<0.000000e+00> : vector<8x32xf32>
    %32 = tpu.matmul %30, %31, %cst_17 {dimension_numbers = #tpu.dot_dimension_numbers<[1], [0], [0], [1], [0, 0, 1, 1], [], []>} : vector<8x32xf32>, vector<32x32xf32>, vector<8x32xf32> -> vector<8x32xf32>
    %33 = arith.addf %29, %32 : vector<8x32xf32>
    %34 = math.tanh %33 : vector<8x32xf32>
    %35 = vector.shape_cast %34 : vector<8x32xf32> to vector<1x8x32xf32>
    %c0_18 = arith.constant 0 : index
    %c0_19 = arith.constant 0 : index
    %c0_20 = arith.constant 0 : index
    %36 = vector.load %arg6[%c0_18, %c0_19, %c0_20] : memref<1x8x32xf32, #tpu.memory_space<vmem>>, vector<1x8x32xf32>
    tpu.vector_store %arg6[%c0_18, %c0_19, %c0_20], %35 {strides = array<i32>} : memref<1x8x32xf32, #tpu.memory_space<vmem>>, vector<1x8x32xf32>,
    %c0_21 = arith.constant 0 : index
    %c0_22 = arith.constant 0 : index
    %c0_23 = arith.constant 0 : index
    %37 = vector.load %arg7[%c0_21, %c0_22, %c0_23] : memref<1x1x8xf32, #tpu.memory_space<vmem>>, vector<1x1x8xf32>
    tpu.vector_store %arg7[%c0_21, %c0_22, %c0_23], %20 {strides = array<i32>} : memref<1x1x8xf32, #tpu.memory_space<vmem>>, vector<1x1x8xf32>,
    return
  }
  func.func @transform_0(%arg0: i32) -> (i32, i32, i32) {
    %c0_i32 = arith.constant 0 : i32
    %c0_i32_0 = arith.constant 0 : i32
    %c0_i32_1 = arith.constant 0 : i32
    return %arg0, %c0_i32, %c0_i32_0 : i32, i32, i32
  }
  func.func @transform_1(%arg0: i32) -> (i32, i32, i32) {
    %c0_i32 = arith.constant 0 : i32
    %c0_i32_0 = arith.constant 0 : i32
    %c0_i32_1 = arith.constant 0 : i32
    return %arg0, %c0_i32, %c0_i32_0 : i32, i32, i32
  }
  func.func @transform_2(%arg0: i32) -> (i32, i32, i32) {
    %c0_i32 = arith.constant 0 : i32
    %c0_i32_0 = arith.constant 0 : i32
    %c0_i32_1 = arith.constant 0 : i32
    return %arg0, %c0_i32, %c0_i32_0 : i32, i32, i32
  }
  func.func @transform_3(%arg0: i32) -> (i32, i32) {
    %c0_i32 = arith.constant 0 : i32
    %c0_i32_0 = arith.constant 0 : i32
    %c0_i32_1 = arith.constant 0 : i32
    return %c0_i32, %c0_i32_0 : i32, i32
  }
  func.func @transform_4(%arg0: i32) -> (i32, i32) {
    %c0_i32 = arith.constant 0 : i32
    %c0_i32_0 = arith.constant 0 : i32
    %c0_i32_1 = arith.constant 0 : i32
    return %c0_i32, %c0_i32_0 : i32, i32
  }
  func.func @transform_5(%arg0: i32) -> (i32, i32, i32) {
    %c0_i32 = arith.constant 0 : i32
    %c0_i32_0 = arith.constant 0 : i32
    %c0_i32_1 = arith.constant 0 : i32
    return %arg0, %c0_i32, %c0_i32_0 : i32, i32, i32
  }
  func.func @transform_6(%arg0: i32) -> (i32, i32, i32) {
    %c0_i32 = arith.constant 0 : i32
    %c0_i32_0 = arith.constant 0 : i32
    %c0_i32_1 = arith.constant 0 : i32
    return %arg0, %c0_i32, %c0_i32_0 : i32, i32, i32
  }
}

</mosaic_0001>

<llo_original>
// kernel: tpu_custom_call.1
$region0: #{tpu_custom_call.1}
  #allocation0 [shape = 'u32[]', space=smem, size = 0x4, offset = 0x4, fixed_abs, tag = 'smem constant byte address 0x4 - core index']
  #allocation1 [shape = 'u32[144,128]{1,0:T(1,128)}', space=vmem, size = 0x12000, scoped, tag = 'internal scratch']
  %s0 = inlined_call_operand.hbm [shape: f32[2,8,32], index: 0, kind: input, shape index: {}]
  %s1 = inlined_call_operand.hbm [shape: f32[2,1,32], index: 1, kind: input, shape index: {}]
  %s2 = inlined_call_operand.vmem [shape: s32[2,1,8], index: 2, kind: input, shape index: {}]
  %s3 = inlined_call_operand.hbm [shape: f32[32,32], index: 3, kind: input, shape index: {}]
  %s4 = inlined_call_operand.hbm [shape: f32[32,32], index: 4, kind: input, shape index: {}]
  %s5 = inlined_call_operand.hbm [shape: f32[2,8,32], index: 5, kind: output, shape index: {0}]
  %s6 = inlined_call_operand.hbm [shape: f32[2,1,8], index: 6, kind: output, shape index: {1}]
  %7 = xla_tuple %s5, %s6
  %s8 = sld [smem:[#allocation0]]
  $region77: #{tpu_custom_call.1} parent=0
    _
  %s10 = ssub.s32 1, %s8
  %s11 = scalar_select 0, %s10, %s8
  $region1: #{tpu_custom_call.1} parent=0
    #allocation2 [shape = 'u8[8192]{0}', space=vmem, size = 0x2000, scoped, tag = 'input window, operand 0']
    #allocation3 [shape = 's32[2]{0}', space=sflag, size = 0x8, scoped, tag = 'scoped memory for tpu_custom_call.1']
    #allocation4 [shape = 's32[2]{0}', space=sflag, size = 0x8, scoped, tag = 'scoped memory for tpu_custom_call.1']
    #allocation5 [shape = 'u8[1024]{0}', space=vmem, size = 0x400, scoped, tag = 'input window, operand 1']
    #allocation6 [shape = 's32[2]{0}', space=sflag, size = 0x8, scoped, tag = 'scoped memory for tpu_custom_call.1']
    #allocation7 [shape = 'u8[16384]{0}', space=vmem, size = 0x4000, scoped, tag = 'input window, operand 3, single buffered']
    #allocation8 [shape = 'u8[16384]{0}', space=vmem, size = 0x4000, scoped, tag = 'input window, operand 4, single buffered']
    #allocation9 [shape = 's32[1]{0}', space=sflag, size = 0x4, scoped, tag = 'scoped memory for tpu_custom_call.1']
    #allocation10 [shape = 'u8[8192]{0}', space=vmem, size = 0x2000, scoped, tag = 'output window, operand 0']
    #allocation11 [shape = 'u8[1024]{0}', space=vmem, size = 0x400, scoped, tag = 'output window, operand 1']
    #allocation12 [shape = 's32[2]{0}', space=sflag, size = 0x8, scoped, tag = 'scoped memory for tpu_custom_call.1']
    %12 = vsyncpa [#allocation3], 0
    %s13 = scalar_lea.sflag [#allocation3], 1
    %14 = vsyncpa %s13, 0
    %15 = vsyncpa [#allocation6], 0
    %s16 = scalar_lea.sflag [#allocation6], 1
    %17 = vsyncpa %s16, 0
    %18 = vsyncpa [#allocation9], 0
    %19 = vsyncpa [#allocation4], 0
    %s20 = scalar_lea.sflag [#allocation4], 1
    %21 = vsyncpa %s20, 0
    %22 = vsyncpa [#allocation12], 0
    %s23 = scalar_lea.sflag [#allocation12], 1
    %24 = vsyncpa %s23, 0
    loop: start=0, step=1, limit=4
    $region2: #{tpu_custom_call.1} parent=1 // loop_pre_header
      _
    $region3: #{tpu_custom_call.1} parent=1 // loop_header
      %s26 = sphi 0, %s30
      %p27 = scmp.ge.s32.totalorder %s26, 4
      %s36 = sphi 0, %s38
      %s39 = sphi 0, %s36
      %s40 = sphi 0, %s39
      %s56 = sphi 0, %s40
      %s62 = sphi 0, %s64
      %s65 = sphi 0, %s62
      %s66 = sphi 0, %s65
      %s82 = sphi 0, %s66
      %s88 = sphi 0, %s90
      %s91 = sphi 0, %s88
      %s92 = sphi 0, %s91
      %s108 = sphi 0, %s92
      %s112 = sphi 0, %s112
      %s114 = sphi 0, %s112
      %s115 = sphi 0, %s114
      %s129 = sphi 0, %s115
      %s133 = sphi 0, %s133
      %s135 = sphi 0, %s133
      %s136 = sphi 0, %s135
      %s150 = sphi 0, %s136
      %s156 = sphi 0, %s158
      %s159 = sphi 0, %s156
      %s160 = sphi 0, %s159
      %s176 = sphi 0, %s160
      %s182 = sphi 0, %s184
      %s185 = sphi 0, %s182
      %s186 = sphi 0, %s185
      %s202 = sphi 0, %s186
    $region4: #{tpu_custom_call.1} parent=1 // loop_header_branch
      %29 = sbr.rel (%p27) target = $region8
    $region5: #{tpu_custom_call.1} parent=1 // loop_body
      %s31 = ssub.s32 %s26, 1
      %s32 = ssub.s32 %s26, 2
      %s33 = sadd.s32 %s26, 1
      %s34 = ssub.s32 %s26, %s33
      %p35 = scmp.eq.s32.totalorder %s34, 0
      %s37 = sadd.s32 %s36, 1
      %s38 = scalar_select %p35, %s36, %s37
      %p41 = pneg %p35
      %p42 = scmp.eq.s32.totalorder %s26, 1
      %p43 = por %p41, %p42
      %p44 = scmp.ne.s32.totalorder %s36, %s39
      %p45 = scmp.eq.s32.totalorder %s26, 0
      %p46 = por %p44, %p45
      %p47 = scmp.ne.s32.totalorder %s36, %s39
      %p48 = scmp.eq.s32.totalorder %s31, 1
      %p49 = por %p47, %p48
      %p50 = scmp.ne.s32.totalorder %s39, %s40
      %p51 = scmp.eq.s32.totalorder %s31, 0
      %p52 = por %p50, %p51
      %p53 = scmp.ne.s32.totalorder %s39, %s40
      %p54 = scmp.eq.s32.totalorder %s32, 1
      %p55 = por %p53, %p54
      %p57 = scmp.ne.s32.totalorder %s40, %s56
      %p58 = scmp.eq.s32.totalorder %s32, 0
      %p59 = por %p57, %p58
      %s60 = ssub.s32 %s26, %s33
      %p61 = scmp.eq.s32.totalorder %s60, 0
      %s63 = sadd.s32 %s62, 1
      %s64 = scalar_select %p61, %s62, %s63
      %p67 = pneg %p61
      %p68 = scmp.eq.s32.totalorder %s26, 1
      %p69 = por %p67, %p68
      %p70 = scmp.ne.s32.totalorder %s62, %s65
      %p71 = scmp.eq.s32.totalorder %s26, 0
      %p72 = por %p70, %p71
      %p73 = scmp.ne.s32.totalorder %s62, %s65
      %p74 = scmp.eq.s32.totalorder %s31, 1
      %p75 = por %p73, %p74
      %p76 = scmp.ne.s32.totalorder %s65, %s66
      %p77 = scmp.eq.s32.totalorder %s31, 0
      %p78 = por %p76, %p77
      %p79 = scmp.ne.s32.totalorder %s65, %s66
      %p80 = scmp.eq.s32.totalorder %s32, 1
      %p81 = por %p79, %p80
      %p83 = scmp.ne.s32.totalorder %s66, %s82
      %p84 = scmp.eq.s32.totalorder %s32, 0
      %p85 = por %p83, %p84
      %s86 = ssub.s32 %s26, %s33
      %p87 = scmp.eq.s32.totalorder %s86, 0
      %s89 = sadd.s32 %s88, 1
      %s90 = scalar_select %p87, %s88, %s89
      %p93 = pneg %p87
      %p94 = scmp.eq.s32.totalorder %s26, 1
      %p95 = por %p93, %p94
      %p96 = scmp.ne.s32.totalorder %s88, %s91
      %p97 = scmp.eq.s32.totalorder %s26, 0
      %p98 = por %p96, %p97
      %p99 = scmp.ne.s32.totalorder %s88, %s91
      %p100 = scmp.eq.s32.totalorder %s31, 1
      %p101 = por %p99, %p100
      %p102 = scmp.ne.s32.totalorder %s91, %s92
      %p103 = scmp.eq.s32.totalorder %s31, 0
      %p104 = por %p102, %p103
      %p105 = scmp.ne.s32.totalorder %s91, %s92
      %p106 = scmp.eq.s32.totalorder %s32, 1
      %p107 = por %p105, %p106
      %p109 = scmp.ne.s32.totalorder %s92, %s108
      %p110 = scmp.eq.s32.totalorder %s32, 0
      %p111 = por %p109, %p110
      %s113 = sadd.s32 %s112, 1
      %p116 = scmp.eq.s32.totalorder %s26, 1
      %p117 = scmp.ne.s32.totalorder %s112, %s114
      %p118 = scmp.eq.s32.totalorder %s26, 0
      %p119 = por %p117, %p118
      %p120 = scmp.ne.s32.totalorder %s112, %s114
      %p121 = scmp.eq.s32.totalorder %s31, 1
      %p122 = por %p120, %p121
      %p123 = scmp.ne.s32.totalorder %s114, %s115
      %p124 = scmp.eq.s32.totalorder %s31, 0
      %p125 = por %p123, %p124
      %p126 = scmp.ne.s32.totalorder %s114, %s115
      %p127 = scmp.eq.s32.totalorder %s32, 1
      %p128 = por %p126, %p127
      %p130 = scmp.ne.s32.totalorder %s115, %s129
      %p131 = scmp.eq.s32.totalorder %s32, 0
      %p132 = por %p130, %p131
      %s134 = sadd.s32 %s133, 1
      %p137 = scmp.eq.s32.totalorder %s26, 1
      %p138 = scmp.ne.s32.totalorder %s133, %s135
      %p139 = scmp.eq.s32.totalorder %s26, 0
      %p140 = por %p138, %p139
      %p141 = scmp.ne.s32.totalorder %s133, %s135
      %p142 = scmp.eq.s32.totalorder %s31, 1
      %p143 = por %p141, %p142
      %p144 = scmp.ne.s32.totalorder %s135, %s136
      %p145 = scmp.eq.s32.totalorder %s31, 0
      %p146 = por %p144, %p145
      %p147 = scmp.ne.s32.totalorder %s135, %s136
      %p148 = scmp.eq.s32.totalorder %s32, 1
      %p149 = por %p147, %p148
      %p151 = scmp.ne.s32.totalorder %s136, %s150
      %p152 = scmp.eq.s32.totalorder %s32, 0
      %p153 = por %p151, %p152
      %s154 = ssub.s32 %s26, %s33
      %p155 = scmp.eq.s32.totalorder %s154, 0
      %s157 = sadd.s32 %s156, 1
      %s158 = scalar_select %p155, %s156, %s157
      %p161 = pneg %p155
      %p162 = scmp.eq.s32.totalorder %s26, 1
      %p163 = por %p161, %p162
      %p164 = scmp.ne.s32.totalorder %s156, %s159
      %p165 = scmp.eq.s32.totalorder %s26, 0
      %p166 = por %p164, %p165
      %p167 = scmp.ne.s32.totalorder %s156, %s159
      %p168 = scmp.eq.s32.totalorder %s31, 1
      %p169 = por %p167, %p168
      %p170 = scmp.ne.s32.totalorder %s159, %s160
      %p171 = scmp.eq.s32.totalorder %s31, 0
      %p172 = por %p170, %p171
      %p173 = scmp.ne.s32.totalorder %s159, %s160
      %p174 = scmp.eq.s32.totalorder %s32, 1
      %p175 = por %p173, %p174
      %p177 = scmp.ne.s32.totalorder %s160, %s176
      %p178 = scmp.eq.s32.totalorder %s32, 0
      %p179 = por %p177, %p178
      %s180 = ssub.s32 %s26, %s33
      %p181 = scmp.eq.s32.totalorder %s180, 0
      %s183 = sadd.s32 %s182, 1
      %s184 = scalar_select %p181, %s182, %s183
      %p187 = pneg %p181
      %p188 = scmp.eq.s32.totalorder %s26, 1
      %p189 = por %p187, %p188
      %p190 = scmp.ne.s32.totalorder %s182, %s185
      %p191 = scmp.eq.s32.totalorder %s26, 0
      %p192 = por %p190, %p191
      %p193 = scmp.ne.s32.totalorder %s182, %s185
      %p194 = scmp.eq.s32.totalorder %s31, 1
      %p195 = por %p193, %p194
      %p196 = scmp.ne.s32.totalorder %s185, %s186
      %p197 = scmp.eq.s32.totalorder %s31, 0
      %p198 = por %p196, %p197
      %p199 = scmp.ne.s32.totalorder %s185, %s186
      %p200 = scmp.eq.s32.totalorder %s32, 1
      %p201 = por %p199, %p200
      %p203 = scmp.ne.s32.totalorder %s186, %s202
      %p204 = scmp.eq.s32.totalorder %s32, 0
      %p205 = por %p203, %p204
      %p206 = scmp.le.s32.totalorder 1, %s26
      %p207 = scmp.lt.s32.totalorder %s26, 3
      %p208 = pnand %p206, %p207
      %p209 = pneg %p208
      // Predicated region
      $region9: #{tpu_custom_call.1} parent=5 // pred_check
        _
      $region10: #{tpu_custom_call.1} parent=5 // pred_check_branch
        %211 = sbr.rel (%p208) target = $region12
      $region11: #{tpu_custom_call.1} parent=5 // pred_region
        %s212 = ssub.s32 %s26, 1
        // Predicated region
        $region13: #{tpu_custom_call.1} parent=11 // pred_check
          %p213 = pneg %p125
        $region14: #{tpu_custom_call.1} parent=11 // pred_check_branch
          %215 = sbr.rel (%p213) target = $region16
        $region15: #{tpu_custom_call.1} parent=11 // pred_region
          %s217 = ssub.s32 512, 512
          %218 = vsyncadd [#allocation6], %s217
          %s219 = sshll.u32 [#allocation7], 4
          %s220 = int_to_ptr.vmem [resolvable:$true] %s219
          %225 = dma.hbm_to_vmem [thread:$0]  %s3, 512, %s220, [#allocation6], 128, 128, 8
        $region16: #{tpu_custom_call.1} parent=11 // pred_fallthru
          _
        // Predicated region
        $region17: #{tpu_custom_call.1} parent=11 // pred_check
          %p226 = pneg %p146
        $region18: #{tpu_custom_call.1} parent=11 // pred_check_branch
          %228 = sbr.rel (%p226) target = $region20
        $region19: #{tpu_custom_call.1} parent=11 // pred_region
          %s230 = ssub.s32 512, 512
          %231 = vsyncadd [#allocation9], %s230
          %s232 = sshll.u32 [#allocation8], 4
          %s233 = int_to_ptr.vmem [resolvable:$true] %s232
          %238 = dma.hbm_to_vmem [thread:$0]  %s4, 512, %s233, [#allocation9], 128, 128, 8
        $region20: #{tpu_custom_call.1} parent=11 // pred_fallthru
          _
      $region12: #{tpu_custom_call.1} parent=5 // pred_fallthru
        _
      %p239 = scmp.lt.s32.totalorder %s26, 2
      // Predicated region
      $region21: #{tpu_custom_call.1} parent=5 // pred_check
        %p240 = pneg %p239
      $region22: #{tpu_custom_call.1} parent=5 // pred_check_branch
        %242 = sbr.rel (%p240) target = $region24
      $region23: #{tpu_custom_call.1} parent=5 // pred_region
        // Predicated region
        $region25: #{tpu_custom_call.1} parent=23 // pred_check
          %p243 = pneg %p46
        $region26: #{tpu_custom_call.1} parent=23 // pred_check_branch
          %245 = sbr.rel (%p243) target = $region28
        $region27: #{tpu_custom_call.1} parent=23 // pred_region
          %s246 = sand.u32 %s36, 1
          %s247 = scalar_lea.sflag [#allocation3], %s246
          %s248 = sand.u32 %s36, 1
          %s249 = smul.addr %s248, 8
          %s250 = scalar_lea.vmem [#allocation2], %s249
          %s252 = ssub.s32 128, 128
          %253 = vsyncadd %s247, %s252
          %s254 = smul.addr %s26, 128
          %s255 = scalar_lea.hbm %s0, %s254
          %s257 = sshll.u32 %s250, 4
          %s258 = int_to_ptr.vmem [resolvable:$true] %s257
          %260 = dma.hbm_to_vmem [thread:$0]  %s255, 128, %s258, %s247
        $region28: #{tpu_custom_call.1} parent=23 // pred_fallthru
          _
        // Predicated region
        $region29: #{tpu_custom_call.1} parent=23 // pred_check
          %p261 = pneg %p72
        $region30: #{tpu_custom_call.1} parent=23 // pred_check_branch
          %263 = sbr.rel (%p261) target = $region32
        $region31: #{tpu_custom_call.1} parent=23 // pred_region
          %s264 = sand.u32 %s26, 1
          %s265 = scalar_lea.sflag [#allocation6], %s264
          %s266 = sand.u32 %s62, 1
          %s267 = scalar_lea.vmem [#allocation5], %s266
          %s269 = ssub.s32 16, 16
          %270 = vsyncadd %s265, %s269
          %s271 = smul.addr %s26, 16
          %s272 = scalar_lea.hbm %s1, %s271
          %s274 = sshll.u32 %s267, 4
          %s275 = int_to_ptr.vmem [resolvable:$true] %s274
          %277 = dma.hbm_to_vmem [thread:$0]  %s272, 16, %s275, %s265
        $region32: #{tpu_custom_call.1} parent=23 // pred_fallthru
          _
        // Predicated region
        $region33: #{tpu_custom_call.1} parent=23 // pred_check
          %p278 = pneg %p98
        $region34: #{tpu_custom_call.1} parent=23 // pred_check_branch
          %280 = sbr.rel (%p278) target = $region36
        $region35: #{tpu_custom_call.1} parent=23 // pred_region
          %p281 = scmp.lt.s32.totalorder %s26, 1
          %s282 = scalar_select %p281, %s26, 1
          %s283 = scalar_lea.vmem %s2, %s282
        $region36: #{tpu_custom_call.1} parent=23 // pred_fallthru
          _
      $region24: #{tpu_custom_call.1} parent=5 // pred_fallthru
        _
      %p284 = scmp.le.s32.totalorder 1, %s26
      %p285 = scmp.lt.s32.totalorder %s26, 3
      %p286 = pnand %p284, %p285
      %p287 = pneg %p286
      // Predicated region
      $region37: #{tpu_custom_call.1} parent=5 // pred_check
        _
      $region38: #{tpu_custom_call.1} parent=5 // pred_check_branch
        %289 = sbr.rel (%p286) target = $region40
      $region39: #{tpu_custom_call.1} parent=5 // pred_region
        %s290 = ssub.s32 %s26, 1
        %s291 = sand.u32 %s39, 1
        %s292 = scalar_lea.sflag [#allocation3], %s291
        %s293 = sand.u32 %s39, 1
        %s294 = smul.addr %s293, 8
        %s295 = scalar_lea.vmem [#allocation2], %s294
        // Predicated region
        $region41: #{tpu_custom_call.1} parent=39 // pred_check
          %p296 = pneg %p52
        $region42: #{tpu_custom_call.1} parent=39 // pred_check_branch
          %298 = sbr.rel (%p296) target = $region44
        $region43: #{tpu_custom_call.1} parent=39 // pred_region
          %299 = dma.done %s292, 128
        $region44: #{tpu_custom_call.1} parent=39 // pred_fallthru
          _
        %s300 = sand.u32 %s31, 1
        %s301 = scalar_lea.sflag [#allocation6], %s300
        %s302 = sand.u32 %s65, 1
        %s303 = scalar_lea.vmem [#allocation5], %s302
        // Predicated region
        $region45: #{tpu_custom_call.1} parent=39 // pred_check
          %p304 = pneg %p78
        $region46: #{tpu_custom_call.1} parent=39 // pred_check_branch
          %306 = sbr.rel (%p304) target = $region48
        $region47: #{tpu_custom_call.1} parent=39 // pred_region
          %307 = dma.done %s301, 16
        $region48: #{tpu_custom_call.1} parent=39 // pred_fallthru
          _
        // Predicated region
        $region49: #{tpu_custom_call.1} parent=39 // pred_check
          %p308 = pneg %p125
        $region50: #{tpu_custom_call.1} parent=39 // pred_check_branch
          %310 = sbr.rel (%p308) target = $region52
        $region51: #{tpu_custom_call.1} parent=39 // pred_region
          %311 = dma.done [#allocation6], 512
        $region52: #{tpu_custom_call.1} parent=39 // pred_fallthru
          _
        // Predicated region
        $region53: #{tpu_custom_call.1} parent=39 // pred_check
          %p312 = pneg %p146
        $region54: #{tpu_custom_call.1} parent=39 // pred_check_branch
          %314 = sbr.rel (%p312) target = $region56
        $region55: #{tpu_custom_call.1} parent=39 // pred_region
          %315 = dma.done [#allocation9], 512
        $region56: #{tpu_custom_call.1} parent=39 // pred_fallthru
          _
        %s316 = sand.u32 %s39, 1
        %s317 = scalar_lea.sflag [#allocation3], %s316
        %s318 = sand.u32 %s39, 1
        %s319 = smul.addr %s318, 8
        %s320 = scalar_lea.vmem [#allocation2], %s319
        %p321 = pneg %p52
        %p322 = pneg %p49
        %s323 = sand.u32 %s31, 1
        %s324 = scalar_lea.sflag [#allocation6], %s323
        %s325 = sand.u32 %s65, 1
        %s326 = scalar_lea.vmem [#allocation5], %s325
        %p327 = pneg %p78
        %p328 = pneg %p75
        %p329 = scmp.lt.s32.totalorder %s31, 1
        %s330 = scalar_select %p329, %s31, 1
        %s331 = scalar_lea.vmem %s2, %s330
        %p332 = pneg %p104
        %p333 = pneg %p101
        %p334 = pneg %p125
        %p335 = pneg %p122
        %p336 = pneg %p146
        %p337 = pneg %p143
        %p338 = pneg %p172
        %p339 = pneg %p169
        %s340 = sand.u32 %s159, 1
        %s341 = scalar_lea.sflag [#allocation4], %s340
        %s342 = sand.u32 %s159, 1
        %s343 = smul.addr %s342, 8
        %s344 = scalar_lea.vmem [#allocation10], %s343
        %p345 = pneg %p198
        %p346 = pneg %p195
        %s347 = sand.u32 %s185, 1
        %s348 = scalar_lea.sflag [#allocation12], %s347
        %s349 = sand.u32 %s185, 1
        %s350 = scalar_lea.vmem [#allocation11], %s349
        %p351 = scmp.lt.s32.totalorder %s31, 1
        %s352 = scalar_select %p351, %s31, 1
        %s353 = scalar_lea.vmem %s2, %s352
        %v354 = vld [vmem:[%s295] sm:$0xff]
        %v355 = vld [vmem:[%s303] sm:$0x1]
        %v356 = vld [vmem:[%s353] sm:$0x1]
        %v358 = vlaneseq
        %v359 = vshrl.u32 %v358, 7
        %v360 = vsub.s32 0, %v359
        %v361 = vrot.slane %v355, %v360
        %v363 = vmul.f32 %v354, %v361
        %vm364 = vcmask 261120
        %v365 = vsel %vm364, %v363, 0.0
        %366 = vadd.xlane.f32.xlu0 %v365
        %v367 = vpop.xlane.xlu0 %366
        %vm368 = vcmp.eq.s32.totalorder %v356, 0
        %v370 = vlaneseq
        %v371 = vshrl.u32 %v370, 7
        %v372 = vsub.s32 0, %v371
        %v373 = vrot.slane %v367, %v372
        %v374 = vlaneseq
        %v375 = vshrl.u32 %v374, 7
        %v376 = vsub.s32 1, %v375
        %v377 = vrot.slane %v367, %v376
        %v378 = vlaneseq
        %v379 = vshrl.u32 %v378, 7
        %v380 = vsub.s32 2, %v379
        %v381 = vrot.slane %v367, %v380
        %v382 = vlaneseq
        %v383 = vshrl.u32 %v382, 7
        %v384 = vsub.s32 3, %v383
        %v385 = vrot.slane %v367, %v384
        %v386 = vlaneseq
        %v387 = vshrl.u32 %v386, 7
        %v388 = vsub.s32 4, %v387
        %v389 = vrot.slane %v367, %v388
        %v390 = vlaneseq
        %v391 = vshrl.u32 %v390, 7
        %v392 = vsub.s32 5, %v391
        %v393 = vrot.slane %v367, %v392
        %v394 = vlaneseq
        %v395 = vshrl.u32 %v394, 7
        %v396 = vsub.s32 6, %v395
        %v397 = vrot.slane %v367, %v396
        %v398 = vlaneseq
        %v399 = vshrl.u32 %v398, 7
        %v400 = vsub.s32 7, %v399
        %v401 = vrot.slane %v367, %v400
        %v402 = vcombine.low %v373, %v377
        %v403 = vcombine.low %v381, %v385
        %v404 = vcombine.low %v389, %v393
        %v405 = vcombine.low %v397, %v401
        %v407 = vunpack.c.l.s4 1966171168
        %v408 = vunpack.c.0.s8 %v407
        %v409 = vlaneseq
        %v410 = vshrl.u32 %v409, 7
        %v411 = vsub.s32 %v408, %v410
        %v412 = vrot.slane %v402, %v411
        %v414 = vunpack.c.l.s4 1966171168
        %v415 = vunpack.c.0.s8 %v414
        %v416 = vlaneseq
        %v417 = vshrl.u32 %v416, 7
        %v418 = vsub.s32 %v415, %v417
        %v419 = vrot.slane %v403, %v418
        %v421 = vunpack.c.l.s4 1966171168
        %v422 = vunpack.c.0.s8 %v421
        %v423 = vlaneseq
        %v424 = vshrl.u32 %v423, 7
        %v425 = vsub.s32 %v422, %v424
        %v426 = vrot.slane %v404, %v425
        %v428 = vunpack.c.l.s4 1966171168
        %v429 = vunpack.c.0.s8 %v428
        %v430 = vlaneseq
        %v431 = vshrl.u32 %v430, 7
        %v432 = vsub.s32 %v429, %v431
        %v433 = vrot.slane %v405, %v432
        %v434 = vcombine.low %v412, %v419
        %v435 = vcombine.low %v426, %v433
        %v437 = vunpack.c.l.s4 1966171168
        %v438 = vunpack.c.0.s8 %v437
        %v439 = vlaneseq
        %v440 = vshrl.u32 %v439, 7
        %v441 = vsub.s32 %v438, %v440
        %v442 = vrot.slane %v434, %v441
        %v444 = vunpack.c.l.s4 1966171168
        %v445 = vunpack.c.0.s8 %v444
        %v446 = vlaneseq
        %v447 = vshrl.u32 %v446, 7
        %v448 = vsub.s32 %v445, %v447
        %v449 = vrot.slane %v435, %v448
        %v450 = vcombine.low %v442, %v449
        %451 = vset.pattern.permute.xlu0 0
        %452 = vperm.xlu0 %451, %v450
        %v453 = vpop.permute.xlu0 %452
        %v454 = vlaneseq
        %v455 = vand.u32 %v454, 127
        %v456 = vlaneseq
        %v457 = vshrl.u32 %v456, 7
        %v458 = vsub.s32 %v455, %v457
        %v459 = vrot.slane %v453, %v458
        %v461 = vunpack.c.l.s4 1966171168
        %v462 = vunpack.c.0.s8 %v461
        %v463 = vlaneseq
        %v464 = vshrl.u32 %v463, 7
        %v465 = vsub.s32 %v462, %v464
        %v466 = vrot.slane %v459, %v465
        %v468 = vunpack.c.l.s4 1966171168
        %v469 = vunpack.c.0.s8 %v468
        %v470 = vlaneseq
        %v471 = vshrl.u32 %v470, 7
        %v472 = vsub.s32 %v469, %v471
        %v473 = vrot.slane %v466, %v472
        %v475 = vsel %vm368, -inf, %v473
        %vm476 = vcmask 57344
        %v477 = vsel %vm476, %v475, -inf
        %478 = vmax.xlane.f32.xlu0 %v477
        %v479 = vpop.xlane.xlu0 %478
        %v480 = vsub.f32 %v475, %v479
        %v481 = vmul.f32 %v480, 1.442695
        %v482 = vpow.pop %v481
        %v483 = vsel %vm476, %v482, 0.0
        %484 = vadd.xlane.f32.xlu0 %v483
        %v485 = vpop.xlane.xlu0 %484
        %v486 = vrcp.pop %v485
        %v487 = vmul.f32 %v482, %v486
        %488 = vxpose.xlu0.b32.start [1/16] %v487, 128
        %489 = vxpose.xlu0.b32.cont [2/16] 0.0, 128
        %490 = vxpose.xlu0.b32.cont [3/16] 0.0, 128
        %491 = vxpose.xlu0.b32.cont [4/16] 0.0, 128
        %492 = vxpose.xlu0.b32.cont [5/16] 0.0, 128
        %493 = vxpose.xlu0.b32.cont [6/16] 0.0, 128
        %494 = vxpose.xlu0.b32.cont [7/16] 0.0, 128
        %495 = vxpose.xlu0.b32.cont [8/16] 0.0, 128
        %496 = vxpose.xlu0.b32.cont [9/16] 0.0, 128
        %497 = vxpose.xlu0.b32.cont [10/16] 0.0, 128
        %498 = vxpose.xlu0.b32.cont [11/16] 0.0, 128
        %499 = vxpose.xlu0.b32.cont [12/16] 0.0, 128
        %500 = vxpose.xlu0.b32.cont [13/16] 0.0, 128
        %501 = vxpose.xlu0.b32.cont [14/16] 0.0, 128
        %502 = vxpose.xlu0.b32.cont [15/16] 0.0, 128
        %503 = vxpose.xlu0.b32.end [16/16] 0.0, 128
        %v504 = vpop.trf.xlu0
        %v505 = vpop.trf.xlu0
        %v506 = vpop.trf.xlu0
        %v507 = vpop.trf.xlu0
        %v508 = vpop.trf.xlu0
        %v509 = vpop.trf.xlu0
        %v510 = vpop.trf.xlu0
        %v511 = vpop.trf.xlu0
        %v512 = vpop.trf.xlu0
        %v513 = vpop.trf.xlu0
        %v514 = vpop.trf.xlu0
        %v515 = vpop.trf.xlu0
        %v516 = vpop.trf.xlu0
        %v517 = vpop.trf.xlu0
        %v518 = vpop.trf.xlu0
        %v519 = vpop.trf.xlu0
        %521 = vset.pattern.permute.xlu0 0
        %522 = vperm.xlu0 %521, %v504
        %v523 = vpop.permute.xlu0 %522
        %v525 = vmul.f32 %v523, %v361
        %v526 = vadd.f32 %v525, 0.0
        %v527 = vld [vmem:[#allocation7] sm:$0xff]
        %v528 = vld [vmem:[#allocation7 + $0x8] sm:$0xff]
        %v529 = vld [vmem:[#allocation7 + $0x10] sm:$0xff]
        %v530 = vld [vmem:[#allocation7 + $0x18] sm:$0xff]
        %v531 = vld [vmem:[#allocation8] sm:$0xff]
        %v532 = vld [vmem:[#allocation8 + $0x8] sm:$0xff]
        %v533 = vld [vmem:[#allocation8 + $0x10] sm:$0xff]
        %v534 = vld [vmem:[#allocation8 + $0x18] sm:$0xff]
        %v536 = vsel %vm364, %v354, 0
        %538 = vmatprep.subr.mxu0 0.0
        %539 = vmatpush1.msra.mxu0 0.0
        %540 = vmatprep.subr.mxu0 0.0
        %541 = vmatpush1.msra.mxu0 0.0
        %542 = vmatprep.subr.mxu0 0.0
        %543 = vmatpush1.msra.mxu0 0.0
        %544 = vmatprep.subr.mxu0 0.0
        %545 = vmatpush1.msra.mxu0 0.0
        %546 = vmatprep.subr.mxu0 0.0
        %547 = vmatpush1.msra.mxu0 0.0
        %548 = vmatprep.subr.mxu0 0.0
        %549 = vmatpush1.msra.mxu0 0.0
        %550 = vmatprep.subr.mxu0 0.0
        %551 = vmatpush1.msra.mxu0 0.0
        %552 = vmatprep.subr.mxu0 0.0
        %553 = vmatpush1.msra.mxu0 0.0
        %554 = vmatprep.subr.mxu0 0.0
        %555 = vmatpush1.msra.mxu0 0.0
        %556 = vmatprep.subr.mxu0 0.0
        %557 = vmatpush1.msra.mxu0 0.0
        %558 = vmatprep.subr.mxu0 0.0
        %559 = vmatpush1.msra.mxu0 0.0
        %560 = vmatprep.subr.mxu0 0.0
        %561 = vmatpush1.msra.mxu0 0.0
        %562 = vmatprep.subr.mxu0 0.0
        %563 = vmatpush1.msra.mxu0 %v534
        %564 = vmatprep.subr.mxu0 0.0
        %565 = vmatpush1.msra.mxu0 %v533
        %566 = vmatprep.subr.mxu0 0.0
        %567 = vmatpush1.msra.mxu0 %v532
        %568 = vmatprep.subr.mxu0 0.0
        %569 = vmatpush1.msra.mxu0 %v531
        %570 = vmatprep.subr.mxu0 0.0
        %571 = vmatpush2.msra.mxu0 0.0
        %572 = vmatprep.subr.mxu0 0.0
        %573 = vmatpush2.msra.mxu0 0.0
        %574 = vmatprep.subr.mxu0 0.0
        %575 = vmatpush2.msra.mxu0 0.0
        %576 = vmatprep.subr.mxu0 0.0
        %577 = vmatpush2.msra.mxu0 0.0
        %578 = vmatprep.subr.mxu0 0.0
        %579 = vmatpush2.msra.mxu0 0.0
        %580 = vmatprep.subr.mxu0 0.0
        %581 = vmatpush2.msra.mxu0 0.0
        %582 = vmatprep.subr.mxu0 0.0
        %583 = vmatpush2.msra.mxu0 0.0
        %584 = vmatprep.subr.mxu0 0.0
        %585 = vmatpush2.msra.mxu0 0.0
        %586 = vmatprep.subr.mxu0 0.0
        %587 = vmatpush2.msra.mxu0 0.0
        %588 = vmatprep.subr.mxu0 0.0
        %589 = vmatpush2.msra.mxu0 0.0
        %590 = vmatprep.subr.mxu0 0.0
        %591 = vmatpush2.msra.mxu0 0.0
        %592 = vmatprep.subr.mxu0 0.0
        %593 = vmatpush2.msra.mxu0 0.0
        %594 = vmatprep.subr.mxu0 0.0
        %595 = vmatpush2.msra.mxu0 0.0
        %596 = vmatprep.subr.mxu0 0.0
        %597 = vmatpush2.msra.mxu0 0.0
        %598 = vmatprep.subr.mxu0 0.0
        %599 = vmatpush2.msra.mxu0 0.0
        %600 = vmatprep.subr.mxu0 0.0
        %601 = vmatpush2.msra.mxu0 0.0
        %602 = vmatprep.mubr.f32.mxu0 0.0
        %603 = vmatmul.mubr.f32.gmra.mxu0 %v536
        %v604 = vpop.f32.mrf.mxu0
        %v605 = vadd.f32 0.0, %v604
        %v606 = vpop.f32.mrf.mxu0
        %607 = vdwg.mxu0
        %v609 = vsel %vm364, %v526, 0
        %611 = vmatprep.subr.mxu0 0.0
        %612 = vmatpush1.msra.mxu0 0.0
        %613 = vmatprep.subr.mxu0 0.0
        %614 = vmatpush1.msra.mxu0 0.0
        %615 = vmatprep.subr.mxu0 0.0
        %616 = vmatpush1.msra.mxu0 0.0
        %617 = vmatprep.subr.mxu0 0.0
        %618 = vmatpush1.msra.mxu0 0.0
        %619 = vmatprep.subr.mxu0 0.0
        %620 = vmatpush1.msra.mxu0 0.0
        %621 = vmatprep.subr.mxu0 0.0
        %622 = vmatpush1.msra.mxu0 0.0
        %623 = vmatprep.subr.mxu0 0.0
        %624 = vmatpush1.msra.mxu0 0.0
        %625 = vmatprep.subr.mxu0 0.0
        %626 = vmatpush1.msra.mxu0 0.0
        %627 = vmatprep.subr.mxu0 0.0
        %628 = vmatpush1.msra.mxu0 0.0
        %629 = vmatprep.subr.mxu0 0.0
        %630 = vmatpush1.msra.mxu0 0.0
        %631 = vmatprep.subr.mxu0 0.0
        %632 = vmatpush1.msra.mxu0 0.0
        %633 = vmatprep.subr.mxu0 0.0
        %634 = vmatpush1.msra.mxu0 0.0
        %635 = vmatprep.subr.mxu0 0.0
        %636 = vmatpush1.msra.mxu0 %v530
        %637 = vmatprep.subr.mxu0 0.0
        %638 = vmatpush1.msra.mxu0 %v529
        %639 = vmatprep.subr.mxu0 0.0
        %640 = vmatpush1.msra.mxu0 %v528
        %641 = vmatprep.subr.mxu0 0.0
        %642 = vmatpush1.msra.mxu0 %v527
        %643 = vmatprep.subr.mxu0 0.0
        %644 = vmatpush2.msra.mxu0 0.0
        %645 = vmatprep.subr.mxu0 0.0
        %646 = vmatpush2.msra.mxu0 0.0
        %647 = vmatprep.subr.mxu0 0.0
        %648 = vmatpush2.msra.mxu0 0.0
        %649 = vmatprep.subr.mxu0 0.0
        %650 = vmatpush2.msra.mxu0 0.0
        %651 = vmatprep.subr.mxu0 0.0
        %652 = vmatpush2.msra.mxu0 0.0
        %653 = vmatprep.subr.mxu0 0.0
        %654 = vmatpush2.msra.mxu0 0.0
        %655 = vmatprep.subr.mxu0 0.0
        %656 = vmatpush2.msra.mxu0 0.0
        %657 = vmatprep.subr.mxu0 0.0
        %658 = vmatpush2.msra.mxu0 0.0
        %659 = vmatprep.subr.mxu0 0.0
        %660 = vmatpush2.msra.mxu0 0.0
        %661 = vmatprep.subr.mxu0 0.0
        %662 = vmatpush2.msra.mxu0 0.0
        %663 = vmatprep.subr.mxu0 0.0
        %664 = vmatpush2.msra.mxu0 0.0
        %665 = vmatprep.subr.mxu0 0.0
        %666 = vmatpush2.msra.mxu0 0.0
        %667 = vmatprep.subr.mxu0 0.0
        %668 = vmatpush2.msra.mxu0 0.0
        %669 = vmatprep.subr.mxu0 0.0
        %670 = vmatpush2.msra.mxu0 0.0
        %671 = vmatprep.subr.mxu0 0.0
        %672 = vmatpush2.msra.mxu0 0.0
        %673 = vmatprep.subr.mxu0 0.0
        %674 = vmatpush2.msra.mxu0 0.0
        %675 = vmatprep.mubr.f32.mxu0 0.0
        %676 = vmatmul.mubr.f32.gmra.mxu0 %v609
        %v677 = vpop.f32.mrf.mxu0
        %v678 = vadd.f32 %v605, %v677
        %v679 = vpop.f32.mrf.mxu0
        %680 = vdwg.mxu0
        %v681 = vtanh.pop %v678
        %682 = vst.msk [vmem:[%s344] sm:$0xff] %vm364, %v681
        %683 = vst.msk [vmem:[%s350] sm:$0x1] %vm476, %v487
        %s684 = sand.u32 %s159, 1
        %s685 = scalar_lea.sflag [#allocation4], %s684
        %s686 = sand.u32 %s159, 1
        %s687 = smul.addr %s686, 8
        %s688 = scalar_lea.vmem [#allocation10], %s687
        %s689 = sand.u32 %s185, 1
        %s690 = scalar_lea.sflag [#allocation12], %s689
        %s691 = sand.u32 %s185, 1
        %s692 = scalar_lea.vmem [#allocation11], %s691
        // Predicated region
        $region57: #{tpu_custom_call.1} parent=39 // pred_check
          %p693 = pneg %p169
        $region58: #{tpu_custom_call.1} parent=39 // pred_check_branch
          %695 = sbr.rel (%p693) target = $region60
        $region59: #{tpu_custom_call.1} parent=39 // pred_region
          %s697 = ssub.s32 128, 128
          %698 = vsyncadd %s685, %s697
          %s699 = smul.addr %s31, 128
          %s700 = scalar_lea.hbm %s5, %s699
          %s702 = sshll.u32 %s688, 4
          %s703 = int_to_ptr.vmem [resolvable:$true] %s702
          %705 = dma.vmem_to_hbm [thread:$0]  %s703, 128, %s700, %s685
        $region60: #{tpu_custom_call.1} parent=39 // pred_fallthru
          _
        // Predicated region
        $region61: #{tpu_custom_call.1} parent=39 // pred_check
          %p706 = pneg %p195
        $region62: #{tpu_custom_call.1} parent=39 // pred_check_branch
          %708 = sbr.rel (%p706) target = $region64
        $region63: #{tpu_custom_call.1} parent=39 // pred_region
          %s710 = ssub.s32 16, 16
          %711 = vsyncadd %s690, %s710
          %s712 = smul.addr %s31, 16
          %s713 = scalar_lea.hbm %s6, %s712
          %s715 = sshll.u32 %s692, 4
          %s716 = int_to_ptr.vmem [resolvable:$true] %s715
          %718 = dma.vmem_to_hbm [thread:$0]  %s716, 16, %s713, %s690
        $region64: #{tpu_custom_call.1} parent=39 // pred_fallthru
          _
      $region40: #{tpu_custom_call.1} parent=5 // pred_fallthru
        _
      %p719 = scmp.le.s32.totalorder 2, %s26
      // Predicated region
      $region65: #{tpu_custom_call.1} parent=5 // pred_check
        %p720 = pneg %p719
      $region66: #{tpu_custom_call.1} parent=5 // pred_check_branch
        %722 = sbr.rel (%p720) target = $region68
      $region67: #{tpu_custom_call.1} parent=5 // pred_region
        %s723 = ssub.s32 %s26, 2
        // Predicated region
        $region69: #{tpu_custom_call.1} parent=67 // pred_check
          %p724 = pneg %p175
        $region70: #{tpu_custom_call.1} parent=67 // pred_check_branch
          %726 = sbr.rel (%p724) target = $region72
        $region71: #{tpu_custom_call.1} parent=67 // pred_region
          %s727 = sand.u32 %s160, 1
          %s728 = scalar_lea.sflag [#allocation4], %s727
          %s729 = sand.u32 %s160, 1
          %s730 = smul.addr %s729, 8
          %s731 = scalar_lea.vmem [#allocation10], %s730
          %732 = dma.done %s728, 128
        $region72: #{tpu_custom_call.1} parent=67 // pred_fallthru
          _
        // Predicated region
        $region73: #{tpu_custom_call.1} parent=67 // pred_check
          %p733 = pneg %p201
        $region74: #{tpu_custom_call.1} parent=67 // pred_check_branch
          %735 = sbr.rel (%p733) target = $region76
        $region75: #{tpu_custom_call.1} parent=67 // pred_region
          %s736 = sand.u32 %s186, 1
          %s737 = scalar_lea.sflag [#allocation12], %s736
          %s738 = sand.u32 %s186, 1
          %s739 = scalar_lea.vmem [#allocation11], %s738
          %740 = dma.done %s737, 16
        $region76: #{tpu_custom_call.1} parent=67 // pred_fallthru
          _
      $region68: #{tpu_custom_call.1} parent=5 // pred_fallthru
        _
    $region6: #{tpu_custom_call.1} parent=1 // loop_footer
      %s30 = sadd.s32 1, %s26
    $region7: #{tpu_custom_call.1} parent=1 // loop_footer_branch
      %25 = sbr.rel target = $region3
    $region8: #{tpu_custom_call.1} parent=1 // loop_exit
      _
    %741 = vsyncpa [#allocation3], 1
    %s742 = scalar_lea.sflag [#allocation3], 1
    %743 = vsyncpa %s742, 1
    %744 = vsyncpa [#allocation6], 1
    %s745 = scalar_lea.sflag [#allocation6], 1
    %746 = vsyncpa %s745, 1
    %747 = vsyncpa [#allocation9], 1
    %748 = vsyncpa [#allocation4], 1
    %s749 = scalar_lea.sflag [#allocation4], 1
    %750 = vsyncpa %s749, 1
    %751 = vsyncpa [#allocation12], 1
    %s752 = scalar_lea.sflag [#allocation12], 1
    %753 = vsyncpa %s752, 1

</llo_original>
